<compile_context>
chip_gen: v7x
topology: tpu7x:2x2x1
jax: 0.10.0
libtpu: 0.0.40
codegen_flags: <defaults>
</compile_context>

<pallas_src>
import jax
import jax.numpy as jnp
from jax.experimental import pallas as pl
from jax.experimental.pallas import tpu as pltpu

LANE = 128   # lane width / padded feature size
TB = 128     # row tile for large batches

D_IN, D_H1, D_H2, D_OUT = 12, 24, 8, 4


def _round_up(x, m):
    return ((x + m - 1) // m) * m


# ---------------------------------------------------------------------------
# Pallas kernel: fused fc1 -> fc2 -> fc3 (no activations, matching FC3)
# ---------------------------------------------------------------------------
def fc3_kernel(x_ref, w1_ref, b1_ref, w2_ref, b2_ref, w3_ref, b3_ref, o_ref):
    h = jnp.dot(x_ref[...], w1_ref[...],
                preferred_element_type=jnp.float32) + b1_ref[...]
    h = jnp.dot(h, w2_ref[...],
                preferred_element_type=jnp.float32) + b2_ref[...]
    h = jnp.dot(h, w3_ref[...],
                preferred_element_type=jnp.float32) + b3_ref[...]
    o_ref[...] = h.astype(o_ref.dtype)


# ---------------------------------------------------------------------------
# Wrappers
# ---------------------------------------------------------------------------
def prepare_params(params):
    """Zero-pad all weights/biases to lane-dense 128-wide slabs (done once)."""
    def pad_w(w):
        k, n = w.shape
        return jnp.pad(w, ((0, LANE - k), (0, LANE - n)))

    def pad_b(b):
        return jnp.pad(b.reshape(1, -1), ((0, 0), (0, LANE - b.shape[0])))

    return {
        "w1": pad_w(params["w1"]), "b1": pad_b(params["b1"]),
        "w2": pad_w(params["w2"]), "b2": pad_b(params["b2"]),
        "w3": pad_w(params["w3"]), "b3": pad_b(params["b3"]),
    }


def fc3_forward(x, padded_params):
    """x: (B, 12) float32 -> (B, 4) float32."""
    B, K = x.shape
    assert K == D_IN

    # Row padding: to a multiple of 8 (sublane) for small batches, or to a
    # multiple of TB when the batch is large enough to tile.
    Bpad = _round_up(B, 8)
    if Bpad > TB:
        Bpad = _round_up(B, TB)
        tb = TB
    else:
        tb = Bpad

    xp = jnp.pad(x, ((0, Bpad - B), (0, LANE - K)))

    out = pl.pallas_call(
        fc3_kernel,
        out_shape=jax.ShapeDtypeStruct((Bpad, LANE), jnp.float32),
        grid=(Bpad // tb,),
        in_specs=[
            pl.BlockSpec((tb, LANE), lambda i: (i, 0)),       # x tile
            pl.BlockSpec((LANE, LANE), lambda i: (0, 0)),     # w1
            pl.BlockSpec((1, LANE), lambda i: (0, 0)),        # b1
            pl.BlockSpec((LANE, LANE), lambda i: (0, 0)),     # w2
            pl.BlockSpec((1, LANE), lambda i: (0, 0)),        # b2
            pl.BlockSpec((LANE, LANE), lambda i: (0, 0)),     # w3
            pl.BlockSpec((1, LANE), lambda i: (0, 0)),        # b3
        ],
        out_specs=pl.BlockSpec((tb, LANE), lambda i: (i, 0)),
        compiler_params=pltpu.CompilerParams(
            dimension_semantics=("parallel",)),
    )(xp, padded_params["w1"], padded_params["b1"],
      padded_params["w2"], padded_params["b2"],
      padded_params["w3"], padded_params["b3"])

    return out[:B, :D_OUT]


# ---------------------------------------------------------------------------
# Parameter construction (deterministic, synthetic — mirrors FC3.__init__)
# ---------------------------------------------------------------------------
def make_params(key):
    ks = jax.random.split(key, 6)
    return {
        "w1": 0.1 * jax.random.normal(ks[0], (D_IN, D_H1), jnp.float32),
        "b1": 0.1 * jax.random.normal(ks[1], (D_H1,), jnp.float32),
        "w2": 0.1 * jax.random.normal(ks[2], (D_H1, D_H2), jnp.float32),
        "b2": 0.1 * jax.random.normal(ks[3], (D_H2,), jnp.float32),
        "w3": 0.1 * jax.random.normal(ks[4], (D_H2, D_OUT), jnp.float32),
        "b3": 0.1 * jax.random.normal(ks[5], (D_OUT,), jnp.float32),
    }


def reference_forward(x, params):
    h = x @ params["w1"] + params["b1"]
    h = h @ params["w2"] + params["b2"]
    h = h @ params["w3"] + params["b3"]
    return h


if __name__ == "__main__":
    B = 8
    key = jax.random.PRNGKey(0)
    k_x, k_p = jax.random.split(key)
    x = jax.random.normal(k_x, (B, D_IN), jnp.float32)
    params = make_params(k_p)
    padded = prepare_params(params)

    fwd = jax.jit(fc3_forward)
    out = fwd(x, padded)
    jax.block_until_ready(out)

    assert out.shape == (B, D_OUT), out.shape
    ref = reference_forward(x, params)
    assert jnp.allclose(out, ref, atol=1e-5, rtol=1e-5), (
        float(jnp.max(jnp.abs(out - ref))))
    print("KERNEL_OK")
</pallas_src>

<mosaic_0001>
module attributes {stable_mosaic.version = 11 : i64} {
  func.func @fc3_kernel(%arg0: i32, %arg1: memref<8x128xf32, #tpu.memory_space<vmem>>, %arg2: memref<128x128xf32, #tpu.memory_space<vmem>>, %arg3: memref<1x128xf32, #tpu.memory_space<vmem>>, %arg4: memref<128x128xf32, #tpu.memory_space<vmem>>, %arg5: memref<1x128xf32, #tpu.memory_space<vmem>>, %arg6: memref<128x128xf32, #tpu.memory_space<vmem>>, %arg7: memref<1x128xf32, #tpu.memory_space<vmem>>, %arg8: memref<8x128xf32, #tpu.memory_space<vmem>>) attributes {dimension_semantics = [#tpu.dimension_semantics<parallel>], iteration_bounds = array<i64: 1>, scalar_prefetch = 0 : i64, scratch_operands = 0 : i64, tpu.core_type = #tpu.core_type<tc>, window_params = [{transform_indices = @transform_0, window_bounds = array<i64: 8, 128>}, {pipeline_mode = #tpu.pipeline_mode<synchronous>, transform_indices = @transform_1, window_bounds = array<i64: 128, 128>}, {pipeline_mode = #tpu.pipeline_mode<synchronous>, transform_indices = @transform_2, window_bounds = array<i64: 1, 128>}, {pipeline_mode = #tpu.pipeline_mode<synchronous>, transform_indices = @transform_3, window_bounds = array<i64: 128, 128>}, {pipeline_mode = #tpu.pipeline_mode<synchronous>, transform_indices = @transform_4, window_bounds = array<i64: 1, 128>}, {pipeline_mode = #tpu.pipeline_mode<synchronous>, transform_indices = @transform_5, window_bounds = array<i64: 128, 128>}, {pipeline_mode = #tpu.pipeline_mode<synchronous>, transform_indices = @transform_6, window_bounds = array<i64: 1, 128>}, {transform_indices = @transform_7, window_bounds = array<i64: 8, 128>}]} {
    %c0 = arith.constant 0 : index
    %c0_0 = arith.constant 0 : index
    %0 = vector.load %arg1[%c0, %c0_0] : memref<8x128xf32, #tpu.memory_space<vmem>>, vector<8x128xf32>
    %c0_1 = arith.constant 0 : index
    %c0_2 = arith.constant 0 : index
    %1 = vector.load %arg2[%c0_1, %c0_2] : memref<128x128xf32, #tpu.memory_space<vmem>>, vector<128x128xf32>
    %cst = arith.constant dense<0.000000e+00> : vector<8x128xf32>
    %2 = tpu.matmul %0, %1, %cst {dimension_numbers = #tpu.dot_dimension_numbers<[1], [0], [0], [1], [0, 0, 1, 1], [], []>} : vector<8x128xf32>, vector<128x128xf32>, vector<8x128xf32> -> vector<8x128xf32>
    %c0_3 = arith.constant 0 : index
    %c0_4 = arith.constant 0 : index
    %3 = vector.load %arg3[%c0_3, %c0_4] : memref<1x128xf32, #tpu.memory_space<vmem>>, vector<1x128xf32>
    %4 = vector.broadcast %3 : vector<1x128xf32> to vector<8x128xf32>
    %5 = arith.addf %2, %4 : vector<8x128xf32>
    %c0_5 = arith.constant 0 : index
    %c0_6 = arith.constant 0 : index
    %6 = vector.load %arg4[%c0_5, %c0_6] : memref<128x128xf32, #tpu.memory_space<vmem>>, vector<128x128xf32>
    %cst_7 = arith.constant dense<0.000000e+00> : vector<8x128xf32>
    %7 = tpu.matmul %5, %6, %cst_7 {dimension_numbers = #tpu.dot_dimension_numbers<[1], [0], [0], [1], [0, 0, 1, 1], [], []>} : vector<8x128xf32>, vector<128x128xf32>, vector<8x128xf32> -> vector<8x128xf32>
    %c0_8 = arith.constant 0 : index
    %c0_9 = arith.constant 0 : index
    %8 = vector.load %arg5[%c0_8, %c0_9] : memref<1x128xf32, #tpu.memory_space<vmem>>, vector<1x128xf32>
    %9 = vector.broadcast %8 : vector<1x128xf32> to vector<8x128xf32>
    %10 = arith.addf %7, %9 : vector<8x128xf32>
    %c0_10 = arith.constant 0 : index
    %c0_11 = arith.constant 0 : index
    %11 = vector.load %arg6[%c0_10, %c0_11] : memref<128x128xf32, #tpu.memory_space<vmem>>, vector<128x128xf32>
    %cst_12 = arith.constant dense<0.000000e+00> : vector<8x128xf32>
    %12 = tpu.matmul %10, %11, %cst_12 {dimension_numbers = #tpu.dot_dimension_numbers<[1], [0], [0], [1], [0, 0, 1, 1], [], []>} : vector<8x128xf32>, vector<128x128xf32>, vector<8x128xf32> -> vector<8x128xf32>
    %c0_13 = arith.constant 0 : index
    %c0_14 = arith.constant 0 : index
    %13 = vector.load %arg7[%c0_13, %c0_14] : memref<1x128xf32, #tpu.memory_space<vmem>>, vector<1x128xf32>
    %14 = vector.broadcast %13 : vector<1x128xf32> to vector<8x128xf32>
    %15 = arith.addf %12, %14 : vector<8x128xf32>
    %c0_15 = arith.constant 0 : index
    %c0_16 = arith.constant 0 : index
    %16 = vector.load %arg8[%c0_15, %c0_16] : memref<8x128xf32, #tpu.memory_space<vmem>>, vector<8x128xf32>
    tpu.vector_store %arg8[%c0_15, %c0_16], %15 {strides = array<i32>} : memref<8x128xf32, #tpu.memory_space<vmem>>, vector<8x128xf32>,
    return
  }
  func.func @transform_0(%arg0: i32) -> (i32, i32) {
    %c0_i32 = arith.constant 0 : i32
    %c0_i32_0 = arith.constant 0 : i32
    return %arg0, %c0_i32 : i32, i32
  }
  func.func @transform_1(%arg0: i32) -> (i32, i32) {
    %c0_i32 = arith.constant 0 : i32
    %c0_i32_0 = arith.constant 0 : i32
    %c0_i32_1 = arith.constant 0 : i32
    return %c0_i32, %c0_i32_0 : i32, i32
  }
  func.func @transform_2(%arg0: i32) -> (i32, i32) {
    %c0_i32 = arith.constant 0 : i32
    %c0_i32_0 = arith.constant 0 : i32
    %c0_i32_1 = arith.constant 0 : i32
    return %c0_i32, %c0_i32_0 : i32, i32
  }
  func.func @transform_3(%arg0: i32) -> (i32, i32) {
    %c0_i32 = arith.constant 0 : i32
    %c0_i32_0 = arith.constant 0 : i32
    %c0_i32_1 = arith.constant 0 : i32
    return %c0_i32, %c0_i32_0 : i32, i32
  }
  func.func @transform_4(%arg0: i32) -> (i32, i32) {
    %c0_i32 = arith.constant 0 : i32
    %c0_i32_0 = arith.constant 0 : i32
    %c0_i32_1 = arith.constant 0 : i32
    return %c0_i32, %c0_i32_0 : i32, i32
  }
  func.func @transform_5(%arg0: i32) -> (i32, i32) {
    %c0_i32 = arith.constant 0 : i32
    %c0_i32_0 = arith.constant 0 : i32
    %c0_i32_1 = arith.constant 0 : i32
    return %c0_i32, %c0_i32_0 : i32, i32
  }
  func.func @transform_6(%arg0: i32) -> (i32, i32) {
    %c0_i32 = arith.constant 0 : i32
    %c0_i32_0 = arith.constant 0 : i32
    %c0_i32_1 = arith.constant 0 : i32
    return %c0_i32, %c0_i32_0 : i32, i32
  }
  func.func @transform_7(%arg0: i32) -> (i32, i32) {
    %c0_i32 = arith.constant 0 : i32
    %c0_i32_0 = arith.constant 0 : i32
    return %arg0, %c0_i32 : i32, i32
  }
}

</mosaic_0001>

<llo_original>
// kernel: fc3_forward.1
$region0: #{fc3_forward.1}
  #allocation0 [shape = 'u32[]', space=smem, size = 0x4, offset = 0x4, fixed_abs, tag = 'smem constant byte address 0x4 - core index']
  #allocation1 [shape = 'u32[144,128]{1,0:T(1,128)}', space=vmem, size = 0x12000, scoped, tag = 'internal scratch']
  %s0 = inlined_call_operand.vmem [shape: f32[8,128], index: 0, kind: input, shape index: {}]
  %s1 = inlined_call_operand.hbm [shape: f32[128,128], index: 1, kind: input, shape index: {}]
  %s2 = inlined_call_operand.vmem [shape: f32[1,128], index: 2, kind: input, shape index: {}]
  %s3 = inlined_call_operand.hbm [shape: f32[128,128], index: 3, kind: input, shape index: {}]
  %s4 = inlined_call_operand.vmem [shape: f32[1,128], index: 4, kind: input, shape index: {}]
  %s5 = inlined_call_operand.hbm [shape: f32[128,128], index: 5, kind: input, shape index: {}]
  %s6 = inlined_call_operand.vmem [shape: f32[1,128], index: 6, kind: input, shape index: {}]
  %s7 = inlined_call_operand.vmem [shape: f32[8,128], index: 7, kind: output, shape index: {}]
  %s8 = sld [smem:[#allocation0]]
  $region50: #{fc3_forward.1} parent=0
    _
  %s10 = ssub.s32 1, %s8
  %s11 = scalar_select 0, %s10, %s8
  $region1: #{fc3_forward.1} parent=0
    #allocation2 [shape = 'u8[65536]{0}', space=vmem, size = 0x10000, scoped, tag = 'input window, operand 1, single buffered']
    #allocation3 [shape = 's32[1]{0}', space=sflag, size = 0x4, scoped, tag = 'scoped memory for fc3_forward.1']
    #allocation4 [shape = 'u8[65536]{0}', space=vmem, size = 0x10000, scoped, tag = 'input window, operand 3, single buffered']
    #allocation5 [shape = 's32[1]{0}', space=sflag, size = 0x4, scoped, tag = 'scoped memory for fc3_forward.1']
    #allocation6 [shape = 'u8[65536]{0}', space=vmem, size = 0x10000, scoped, tag = 'input window, operand 5, single buffered']
    %12 = vsyncpa [#allocation3], 0
    %13 = vsyncpa [#allocation5], 0
    // Predicated region
    $region2: #{fc3_forward.1} parent=1 // pred_check
      _
    $region3: #{fc3_forward.1} parent=1 // pred_check_branch
      %15 = sbr.rel (0) target = $region5
    $region4: #{fc3_forward.1} parent=1 // pred_region
      _
    $region5: #{fc3_forward.1} parent=1 // pred_fallthru
      _
    // Predicated region
    $region6: #{fc3_forward.1} parent=1 // pred_check
      _
    $region7: #{fc3_forward.1} parent=1 // pred_check_branch
      %17 = sbr.rel (0) target = $region9
    $region8: #{fc3_forward.1} parent=1 // pred_region
      %s19 = ssub.s32 2048, 2048
      %20 = vsyncadd [#allocation3], %s19
      %s21 = sshll.u32 [#allocation2], 4
      %s22 = int_to_ptr.vmem [resolvable:$true] %s21
      %27 = dma.hbm_to_vmem [thread:$0]  %s1, 2048, %s22, [#allocation3], 128, 128, 8
    $region9: #{fc3_forward.1} parent=1 // pred_fallthru
      _
    // Predicated region
    $region10: #{fc3_forward.1} parent=1 // pred_check
      _
    $region11: #{fc3_forward.1} parent=1 // pred_check_branch
      %29 = sbr.rel (0) target = $region13
    $region12: #{fc3_forward.1} parent=1 // pred_region
      _
    $region13: #{fc3_forward.1} parent=1 // pred_fallthru
      _
    // Predicated region
    $region14: #{fc3_forward.1} parent=1 // pred_check
      _
    $region15: #{fc3_forward.1} parent=1 // pred_check_branch
      %31 = sbr.rel (0) target = $region17
    $region16: #{fc3_forward.1} parent=1 // pred_region
      %s33 = ssub.s32 2048, 2048
      %34 = vsyncadd [#allocation5], %s33
      %s35 = sshll.u32 [#allocation4], 4
      %s36 = int_to_ptr.vmem [resolvable:$true] %s35
      %41 = dma.hbm_to_vmem [thread:$0]  %s3, 2048, %s36, [#allocation5], 128, 128, 8
    $region17: #{fc3_forward.1} parent=1 // pred_fallthru
      _
    // Predicated region
    $region18: #{fc3_forward.1} parent=1 // pred_check
      _
    $region19: #{fc3_forward.1} parent=1 // pred_check_branch
      %43 = sbr.rel (0) target = $region21
    $region20: #{fc3_forward.1} parent=1 // pred_region
      _
    $region21: #{fc3_forward.1} parent=1 // pred_fallthru
      _
    // Predicated region
    $region22: #{fc3_forward.1} parent=1 // pred_check
      _
    $region23: #{fc3_forward.1} parent=1 // pred_check_branch
      %45 = sbr.rel (0) target = $region25
    $region24: #{fc3_forward.1} parent=1 // pred_region
      %s47 = ssub.s32 2048, 2048
      %48 = vsyncadd [#allocation5], %s47
      %s49 = sshll.u32 [#allocation6], 4
      %s50 = int_to_ptr.vmem [resolvable:$true] %s49
      %55 = dma.hbm_to_vmem [thread:$0]  %s5, 2048, %s50, [#allocation5], 128, 128, 8
    $region25: #{fc3_forward.1} parent=1 // pred_fallthru
      _
    // Predicated region
    $region26: #{fc3_forward.1} parent=1 // pred_check
      _
    $region27: #{fc3_forward.1} parent=1 // pred_check_branch
      %57 = sbr.rel (0) target = $region29
    $region28: #{fc3_forward.1} parent=1 // pred_region
      _
    $region29: #{fc3_forward.1} parent=1 // pred_fallthru
      _
    // Predicated region
    $region30: #{fc3_forward.1} parent=1 // pred_check
      _
    $region31: #{fc3_forward.1} parent=1 // pred_check_branch
      %59 = sbr.rel (0) target = $region33
    $region32: #{fc3_forward.1} parent=1 // pred_region
      %60 = dma.done [#allocation3], 2048
    $region33: #{fc3_forward.1} parent=1 // pred_fallthru
      _
    // Predicated region
    $region34: #{fc3_forward.1} parent=1 // pred_check
      _
    $region35: #{fc3_forward.1} parent=1 // pred_check_branch
      %62 = sbr.rel (0) target = $region37
    $region36: #{fc3_forward.1} parent=1 // pred_region
      %63 = dma.done [#allocation5], 2048
    $region37: #{fc3_forward.1} parent=1 // pred_fallthru
      _
    // Predicated region
    $region38: #{fc3_forward.1} parent=1 // pred_check
      _
    $region39: #{fc3_forward.1} parent=1 // pred_check_branch
      %65 = sbr.rel (0) target = $region41
    $region40: #{fc3_forward.1} parent=1 // pred_region
      %66 = dma.done [#allocation5], 2048
    $region41: #{fc3_forward.1} parent=1 // pred_fallthru
      _
    %v67 = vld [vmem:[%s0] sm:$0xff]
    %v68 = vld [vmem:[#allocation2] sm:$0xff]
    %v69 = vld [vmem:[#allocation2 + $0x8] sm:$0xff]
    %v70 = vld [vmem:[#allocation2 + $0x10] sm:$0xff]
    %v71 = vld [vmem:[#allocation2 + $0x18] sm:$0xff]
    %v72 = vld [vmem:[#allocation2 + $0x20] sm:$0xff]
    %v73 = vld [vmem:[#allocation2 + $0x28] sm:$0xff]
    %v74 = vld [vmem:[#allocation2 + $0x30] sm:$0xff]
    %v75 = vld [vmem:[#allocation2 + $0x38] sm:$0xff]
    %v76 = vld [vmem:[#allocation2 + $0x40] sm:$0xff]
    %v77 = vld [vmem:[#allocation2 + $0x48] sm:$0xff]
    %v78 = vld [vmem:[#allocation2 + $0x50] sm:$0xff]
    %v79 = vld [vmem:[#allocation2 + $0x58] sm:$0xff]
    %v80 = vld [vmem:[#allocation2 + $0x60] sm:$0xff]
    %v81 = vld [vmem:[#allocation2 + $0x68] sm:$0xff]
    %v82 = vld [vmem:[#allocation2 + $0x70] sm:$0xff]
    %v83 = vld [vmem:[#allocation2 + $0x78] sm:$0xff]
    %v84 = vld [vmem:[%s2] sm:$0x1]
    %v86 = vlaneseq
    %v87 = vshrl.u32 %v86, 7
    %v88 = vsub.s32 0, %v87
    %v89 = vrot.slane %v84, %v88
    %91 = vmatprep.subr.mxu0 0.0
    %92 = vmatpush1.msra.mxu0 %v68
    %93 = vmatprep.subr.mxu0 0.0
    %94 = vmatpush1.msra.mxu0 %v69
    %95 = vmatprep.subr.mxu0 0.0
    %96 = vmatpush1.msra.mxu0 %v70
    %97 = vmatprep.subr.mxu0 0.0
    %98 = vmatpush1.msra.mxu0 %v71
    %99 = vmatprep.subr.mxu0 0.0
    %100 = vmatpush1.msra.mxu0 %v72
    %101 = vmatprep.subr.mxu0 0.0
    %102 = vmatpush1.msra.mxu0 %v73
    %103 = vmatprep.subr.mxu0 0.0
    %104 = vmatpush1.msra.mxu0 %v74
    %105 = vmatprep.subr.mxu0 0.0
    %106 = vmatpush1.msra.mxu0 %v75
    %107 = vmatprep.subr.mxu0 0.0
    %108 = vmatpush1.msra.mxu0 %v76
    %109 = vmatprep.subr.mxu0 0.0
    %110 = vmatpush1.msra.mxu0 %v77
    %111 = vmatprep.subr.mxu0 0.0
    %112 = vmatpush1.msra.mxu0 %v78
    %113 = vmatprep.subr.mxu0 0.0
    %114 = vmatpush1.msra.mxu0 %v79
    %115 = vmatprep.subr.mxu0 0.0
    %116 = vmatpush1.msra.mxu0 %v80
    %117 = vmatprep.subr.mxu0 0.0
    %118 = vmatpush1.msra.mxu0 %v81
    %119 = vmatprep.subr.mxu0 0.0
    %120 = vmatpush1.msra.mxu0 %v82
    %121 = vmatprep.subr.mxu0 0.0
    %122 = vmatpush1.msra.mxu0 %v83
    %123 = vmatprep.subr.mxu0 0.0
    %124 = vmatpush1.msra.mxu0 0.0
    %125 = vmatprep.subr.mxu0 0.0
    %126 = vmatpush1.msra.mxu0 0.0
    %127 = vmatprep.subr.mxu0 0.0
    %128 = vmatpush1.msra.mxu0 0.0
    %129 = vmatprep.subr.mxu0 0.0
    %130 = vmatpush1.msra.mxu0 0.0
    %131 = vmatprep.subr.mxu0 0.0
    %132 = vmatpush1.msra.mxu0 0.0
    %133 = vmatprep.subr.mxu0 0.0
    %134 = vmatpush1.msra.mxu0 0.0
    %135 = vmatprep.subr.mxu0 0.0
    %136 = vmatpush1.msra.mxu0 0.0
    %137 = vmatprep.subr.mxu0 0.0
    %138 = vmatpush1.msra.mxu0 0.0
    %139 = vmatprep.subr.mxu0 0.0
    %140 = vmatpush1.msra.mxu0 0.0
    %141 = vmatprep.subr.mxu0 0.0
    %142 = vmatpush1.msra.mxu0 0.0
    %143 = vmatprep.subr.mxu0 0.0
    %144 = vmatpush1.msra.mxu0 0.0
    %145 = vmatprep.subr.mxu0 0.0
    %146 = vmatpush1.msra.mxu0 0.0
    %147 = vmatprep.subr.mxu0 0.0
    %148 = vmatpush1.msra.mxu0 0.0
    %149 = vmatprep.subr.mxu0 0.0
    %150 = vmatpush1.msra.mxu0 0.0
    %151 = vmatprep.subr.mxu0 0.0
    %152 = vmatpush1.msra.mxu0 0.0
    %153 = vmatprep.subr.mxu0 0.0
    %154 = vmatpush1.msra.mxu0 0.0
    %155 = vmatprep.mubr.f32.mxu0 0.0
    %156 = vmatmul.mubr.f32.gmra.mrb[0].mxu0 %v67
    %v157 = vpop.f32.mrb[0].mxu0
    %v158 = vadd.f32 %v89, %v157
    %v159 = vpop.f32.mrb[0].mxu0
    %160 = vdwg.mxu0
    %v161 = vld [vmem:[#allocation4] sm:$0xff]
    %v162 = vld [vmem:[#allocation4 + $0x8] sm:$0xff]
    %v163 = vld [vmem:[#allocation4 + $0x10] sm:$0xff]
    %v164 = vld [vmem:[#allocation4 + $0x18] sm:$0xff]
    %v165 = vld [vmem:[#allocation4 + $0x20] sm:$0xff]
    %v166 = vld [vmem:[#allocation4 + $0x28] sm:$0xff]
    %v167 = vld [vmem:[#allocation4 + $0x30] sm:$0xff]
    %v168 = vld [vmem:[#allocation4 + $0x38] sm:$0xff]
    %v169 = vld [vmem:[#allocation4 + $0x40] sm:$0xff]
    %v170 = vld [vmem:[#allocation4 + $0x48] sm:$0xff]
    %v171 = vld [vmem:[#allocation4 + $0x50] sm:$0xff]
    %v172 = vld [vmem:[#allocation4 + $0x58] sm:$0xff]
    %v173 = vld [vmem:[#allocation4 + $0x60] sm:$0xff]
    %v174 = vld [vmem:[#allocation4 + $0x68] sm:$0xff]
    %v175 = vld [vmem:[#allocation4 + $0x70] sm:$0xff]
    %v176 = vld [vmem:[#allocation4 + $0x78] sm:$0xff]
    %v177 = vld [vmem:[%s4] sm:$0x1]
    %v179 = vlaneseq
    %v180 = vshrl.u32 %v179, 7
    %v181 = vsub.s32 0, %v180
    %v182 = vrot.slane %v177, %v181
    %184 = vmatprep.subr.mxu0 0.0
    %185 = vmatpush1.msra.mxu0 %v161
    %186 = vmatprep.subr.mxu0 0.0
    %187 = vmatpush1.msra.mxu0 %v162
    %188 = vmatprep.subr.mxu0 0.0
    %189 = vmatpush1.msra.mxu0 %v163
    %190 = vmatprep.subr.mxu0 0.0
    %191 = vmatpush1.msra.mxu0 %v164
    %192 = vmatprep.subr.mxu0 0.0
    %193 = vmatpush1.msra.mxu0 %v165
    %194 = vmatprep.subr.mxu0 0.0
    %195 = vmatpush1.msra.mxu0 %v166
    %196 = vmatprep.subr.mxu0 0.0
    %197 = vmatpush1.msra.mxu0 %v167
    %198 = vmatprep.subr.mxu0 0.0
    %199 = vmatpush1.msra.mxu0 %v168
    %200 = vmatprep.subr.mxu0 0.0
    %201 = vmatpush1.msra.mxu0 %v169
    %202 = vmatprep.subr.mxu0 0.0
    %203 = vmatpush1.msra.mxu0 %v170
    %204 = vmatprep.subr.mxu0 0.0
    %205 = vmatpush1.msra.mxu0 %v171
    %206 = vmatprep.subr.mxu0 0.0
    %207 = vmatpush1.msra.mxu0 %v172
    %208 = vmatprep.subr.mxu0 0.0
    %209 = vmatpush1.msra.mxu0 %v173
    %210 = vmatprep.subr.mxu0 0.0
    %211 = vmatpush1.msra.mxu0 %v174
    %212 = vmatprep.subr.mxu0 0.0
    %213 = vmatpush1.msra.mxu0 %v175
    %214 = vmatprep.subr.mxu0 0.0
    %215 = vmatpush1.msra.mxu0 %v176
    %216 = vmatprep.subr.mxu0 0.0
    %217 = vmatpush1.msra.mxu0 0.0
    %218 = vmatprep.subr.mxu0 0.0
    %219 = vmatpush1.msra.mxu0 0.0
    %220 = vmatprep.subr.mxu0 0.0
    %221 = vmatpush1.msra.mxu0 0.0
    %222 = vmatprep.subr.mxu0 0.0
    %223 = vmatpush1.msra.mxu0 0.0
    %224 = vmatprep.subr.mxu0 0.0
    %225 = vmatpush1.msra.mxu0 0.0
    %226 = vmatprep.subr.mxu0 0.0
    %227 = vmatpush1.msra.mxu0 0.0
    %228 = vmatprep.subr.mxu0 0.0
    %229 = vmatpush1.msra.mxu0 0.0
    %230 = vmatprep.subr.mxu0 0.0
    %231 = vmatpush1.msra.mxu0 0.0
    %232 = vmatprep.subr.mxu0 0.0
    %233 = vmatpush1.msra.mxu0 0.0
    %234 = vmatprep.subr.mxu0 0.0
    %235 = vmatpush1.msra.mxu0 0.0
    %236 = vmatprep.subr.mxu0 0.0
    %237 = vmatpush1.msra.mxu0 0.0
    %238 = vmatprep.subr.mxu0 0.0
    %239 = vmatpush1.msra.mxu0 0.0
    %240 = vmatprep.subr.mxu0 0.0
    %241 = vmatpush1.msra.mxu0 0.0
    %242 = vmatprep.subr.mxu0 0.0
    %243 = vmatpush1.msra.mxu0 0.0
    %244 = vmatprep.subr.mxu0 0.0
    %245 = vmatpush1.msra.mxu0 0.0
    %246 = vmatprep.subr.mxu0 0.0
    %247 = vmatpush1.msra.mxu0 0.0
    %248 = vmatprep.mubr.f32.mxu0 0.0
    %249 = vmatmul.mubr.f32.gmra.mrb[0].mxu0 %v158
    %v250 = vpop.f32.mrb[0].mxu0
    %v251 = vadd.f32 %v182, %v250
    %v252 = vpop.f32.mrb[0].mxu0
    %253 = vdwg.mxu0
    %v254 = vld [vmem:[#allocation6] sm:$0xff]
    %v255 = vld [vmem:[#allocation6 + $0x8] sm:$0xff]
    %v256 = vld [vmem:[#allocation6 + $0x10] sm:$0xff]
    %v257 = vld [vmem:[#allocation6 + $0x18] sm:$0xff]
    %v258 = vld [vmem:[#allocation6 + $0x20] sm:$0xff]
    %v259 = vld [vmem:[#allocation6 + $0x28] sm:$0xff]
    %v260 = vld [vmem:[#allocation6 + $0x30] sm:$0xff]
    %v261 = vld [vmem:[#allocation6 + $0x38] sm:$0xff]
    %v262 = vld [vmem:[#allocation6 + $0x40] sm:$0xff]
    %v263 = vld [vmem:[#allocation6 + $0x48] sm:$0xff]
    %v264 = vld [vmem:[#allocation6 + $0x50] sm:$0xff]
    %v265 = vld [vmem:[#allocation6 + $0x58] sm:$0xff]
    %v266 = vld [vmem:[#allocation6 + $0x60] sm:$0xff]
    %v267 = vld [vmem:[#allocation6 + $0x68] sm:$0xff]
    %v268 = vld [vmem:[#allocation6 + $0x70] sm:$0xff]
    %v269 = vld [vmem:[#allocation6 + $0x78] sm:$0xff]
    %v270 = vld [vmem:[%s6] sm:$0x1]
    %v272 = vlaneseq
    %v273 = vshrl.u32 %v272, 7
    %v274 = vsub.s32 0, %v273
    %v275 = vrot.slane %v270, %v274
    %277 = vmatprep.subr.mxu0 0.0
    %278 = vmatpush1.msra.mxu0 %v254
    %279 = vmatprep.subr.mxu0 0.0
    %280 = vmatpush1.msra.mxu0 %v255
    %281 = vmatprep.subr.mxu0 0.0
    %282 = vmatpush1.msra.mxu0 %v256
    %283 = vmatprep.subr.mxu0 0.0
    %284 = vmatpush1.msra.mxu0 %v257
    %285 = vmatprep.subr.mxu0 0.0
    %286 = vmatpush1.msra.mxu0 %v258
    %287 = vmatprep.subr.mxu0 0.0
    %288 = vmatpush1.msra.mxu0 %v259
    %289 = vmatprep.subr.mxu0 0.0
    %290 = vmatpush1.msra.mxu0 %v260
    %291 = vmatprep.subr.mxu0 0.0
    %292 = vmatpush1.msra.mxu0 %v261
    %293 = vmatprep.subr.mxu0 0.0
    %294 = vmatpush1.msra.mxu0 %v262
    %295 = vmatprep.subr.mxu0 0.0
    %296 = vmatpush1.msra.mxu0 %v263
    %297 = vmatprep.subr.mxu0 0.0
    %298 = vmatpush1.msra.mxu0 %v264
    %299 = vmatprep.subr.mxu0 0.0
    %300 = vmatpush1.msra.mxu0 %v265
    %301 = vmatprep.subr.mxu0 0.0
    %302 = vmatpush1.msra.mxu0 %v266
    %303 = vmatprep.subr.mxu0 0.0
    %304 = vmatpush1.msra.mxu0 %v267
    %305 = vmatprep.subr.mxu0 0.0
    %306 = vmatpush1.msra.mxu0 %v268
    %307 = vmatprep.subr.mxu0 0.0
    %308 = vmatpush1.msra.mxu0 %v269
    %309 = vmatprep.subr.mxu0 0.0
    %310 = vmatpush1.msra.mxu0 0.0
    %311 = vmatprep.subr.mxu0 0.0
    %312 = vmatpush1.msra.mxu0 0.0
    %313 = vmatprep.subr.mxu0 0.0
    %314 = vmatpush1.msra.mxu0 0.0
    %315 = vmatprep.subr.mxu0 0.0
    %316 = vmatpush1.msra.mxu0 0.0
    %317 = vmatprep.subr.mxu0 0.0
    %318 = vmatpush1.msra.mxu0 0.0
    %319 = vmatprep.subr.mxu0 0.0
    %320 = vmatpush1.msra.mxu0 0.0
    %321 = vmatprep.subr.mxu0 0.0
    %322 = vmatpush1.msra.mxu0 0.0
    %323 = vmatprep.subr.mxu0 0.0
    %324 = vmatpush1.msra.mxu0 0.0
    %325 = vmatprep.subr.mxu0 0.0
    %326 = vmatpush1.msra.mxu0 0.0
    %327 = vmatprep.subr.mxu0 0.0
    %328 = vmatpush1.msra.mxu0 0.0
    %329 = vmatprep.subr.mxu0 0.0
    %330 = vmatpush1.msra.mxu0 0.0
    %331 = vmatprep.subr.mxu0 0.0
    %332 = vmatpush1.msra.mxu0 0.0
    %333 = vmatprep.subr.mxu0 0.0
    %334 = vmatpush1.msra.mxu0 0.0
    %335 = vmatprep.subr.mxu0 0.0
    %336 = vmatpush1.msra.mxu0 0.0
    %337 = vmatprep.subr.mxu0 0.0
    %338 = vmatpush1.msra.mxu0 0.0
    %339 = vmatprep.subr.mxu0 0.0
    %340 = vmatpush1.msra.mxu0 0.0
    %341 = vmatprep.mubr.f32.mxu0 0.0
    %342 = vmatmul.mubr.f32.gmra.mrb[0].mxu0 %v251
    %v343 = vpop.f32.mrb[0].mxu0
    %v344 = vadd.f32 %v275, %v343
    %v345 = vpop.f32.mrb[0].mxu0
    %346 = vdwg.mxu0
    %347 = vst [vmem:[%s7] sm:$0xff] %v344
    // Predicated region
    $region42: #{fc3_forward.1} parent=1 // pred_check
      _
    $region43: #{fc3_forward.1} parent=1 // pred_check_branch
      %349 = sbr.rel (0) target = $region45
    $region44: #{fc3_forward.1} parent=1 // pred_region
      _
    $region45: #{fc3_forward.1} parent=1 // pred_fallthru
      _
    // Predicated region
    $region46: #{fc3_forward.1} parent=1 // pred_check
      _
    $region47: #{fc3_forward.1} parent=1 // pred_check_branch
      %351 = sbr.rel (0) target = $region49
    $region48: #{fc3_forward.1} parent=1 // pred_region
      _
    $region49: #{fc3_forward.1} parent=1 // pred_fallthru
      _
    %352 = vsyncpa [#allocation3], 1
    %353 = vsyncpa [#allocation5], 1

</llo_original>
